<compile_context>
chip_gen: v7x
topology: tpu7x:2x2x1
jax: 0.10.0
libtpu: 0.0.40
codegen_flags: <defaults>
</compile_context>

<pallas_src>
import math
import jax
import jax.numpy as jnp
from jax.experimental import pallas as pl
from jax.experimental.pallas import tpu as pltpu

_MAX_TILE_ELEMS = 1024 * 1024  # 4 MiB of f32 per buffer; multiple of 128.


def make_pe_table(d_model: int, max_len: int = 1000) -> jnp.ndarray:
    """Sinusoidal table identical to the PyTorch __init__ (f32, (max_len, d_model))."""
    position = jnp.arange(0, max_len, dtype=jnp.float32)[:, None]            # (L, 1)
    div_term = jnp.exp(
        jnp.arange(0, d_model, 2, dtype=jnp.float32)
        * (-(math.log(10000.0) / d_model))
    )                                                                         # (D/2,)
    angles = position * div_term                                              # (L, D/2)
    pe = jnp.zeros((max_len, d_model), dtype=jnp.float32)
    pe = pe.at[:, 0::2].set(jnp.sin(angles))
    pe = pe.at[:, 1::2].set(jnp.cos(angles))
    return pe


def _add_pe_kernel(x_ref, pe_ref, o_ref):
    # x_ref, pe_ref, o_ref: (1, tile) lane-dense slabs (same rank, no broadcast).
    o_ref[...] = (x_ref[...] + pe_ref[...]).astype(o_ref.dtype)


def positional_encoding_forward(x, pe, offset=0, *, donate_x=False, max_tile_elems=None):
    """x: (B, T, D).  pe: (max_len, D) float32.  Returns x + pe[offset:offset+T]."""
    B, T, D = x.shape
    max_len = pe.shape[0]
    N = T * D
    max_tile = _MAX_TILE_ELEMS if max_tile_elems is None else max_tile_elems

    # --- select the (T, D) window of the table (static slice fuses; no
    #     dynamic_slice copy kernel for the common static-int offset) ----------
    if isinstance(offset, int):
        assert offset + T <= max_len
        pe_slice = pe[offset:offset + T]
    else:
        # traced 0-d offset (torch.Tensor offset in the original module)
        pe_slice = jax.lax.dynamic_slice_in_dim(pe, offset, T, axis=0)

    # --- lane-dense flattened layout --------------------------------------------
    x_flat = x.reshape(B, 1, N)
    pe_flat = pe_slice.reshape(1, N)

    # --- tile the flattened time*feature axis -----------------------------------
    if N <= max_tile:
        tile = N                        # full row: always a legal block shape
        n_tiles = 1
    else:
        tile = max_tile                 # multiple of 128 -> unmasked vst stores
        n_tiles = pl.cdiv(N, tile)      # last block masked if N % tile != 0

    grid = (n_tiles, B)                 # batch innermost => pe tile stays resident

    out_flat = pl.pallas_call(
        _add_pe_kernel,
        out_shape=jax.ShapeDtypeStruct((B, 1, N), x.dtype),
        grid_spec=pltpu.PrefetchScalarGridSpec(
            num_scalar_prefetch=0,
            grid=grid,
            in_specs=[
                pl.BlockSpec((pl.Squeezed(), 1, tile), lambda t, b: (b, 0, t)),
                pl.BlockSpec((1, tile), lambda t, b: (0, t)),
            ],
            out_specs=pl.BlockSpec((pl.Squeezed(), 1, tile), lambda t, b: (b, 0, t)),
        ),
        compiler_params=pltpu.CompilerParams(
            dimension_semantics=("parallel", "parallel"),
            vmem_limit_bytes=32 * 1024 * 1024,
        ),
        input_output_aliases={0: 0} if donate_x else {},
    )(x_flat, pe_flat)

    return out_flat.reshape(B, T, D)


if __name__ == "__main__":
    B, T, D = 2, 8, 32
    max_len = 1000
    offset = 3
    # dropout_rate is a module param but forward() never applies dropout to x.

    key = jax.random.PRNGKey(0)
    x = jax.random.normal(key, (B, T, D), dtype=jnp.float32)
    pe = make_pe_table(D, max_len)

    ref = x + pe[offset:offset + T][None, :, :]

    # Default (single-tile) path.
    out = positional_encoding_forward(x, pe, offset=offset)
    out = jax.block_until_ready(out)
    assert out.shape == (B, T, D)
    assert jnp.allclose(out, ref, atol=1e-6), "mismatch vs reference"

    # Exercise the multi-tile grid path (grid = (2, B)) at the same small shape.
    out_tiled = positional_encoding_forward(x, pe, offset=offset, max_tile_elems=128)
    out_tiled = jax.block_until_ready(out_tiled)
    assert jnp.allclose(out_tiled, ref, atol=1e-6), "mismatch vs reference (tiled path)"

    # Exercise the traced-offset path (torch.Tensor offset in the original module).
    out_dyn = positional_encoding_forward(x, pe, offset=jnp.int32(offset))
    out_dyn = jax.block_until_ready(out_dyn)
    assert jnp.allclose(out_dyn, ref, atol=1e-6), "mismatch vs reference (traced offset)"

    print("KERNEL_OK")
</pallas_src>

<mosaic_0001>
module attributes {stable_mosaic.version = 11 : i64} {
  func.func @_add_pe_kernel(%arg0: i32, %arg1: i32, %arg2: memref<1x1x256xf32, #tpu.memory_space<vmem>>, %arg3: memref<1x256xf32, #tpu.memory_space<vmem>>, %arg4: memref<1x1x256xf32, #tpu.memory_space<vmem>>) attributes {dimension_semantics = [#tpu.dimension_semantics<parallel>, #tpu.dimension_semantics<parallel>], iteration_bounds = array<i64: 1, 2>, scalar_prefetch = 0 : i64, scratch_operands = 0 : i64, tpu.core_type = #tpu.core_type<tc>, window_params = [{transform_indices = @transform_0, window_bounds = array<i64: 1, 1, 256>}, {transform_indices = @transform_1, window_bounds = array<i64: 1, 256>}, {transform_indices = @transform_2, window_bounds = array<i64: 1, 1, 256>}]} {
    %c0 = arith.constant 0 : index
    %c0_0 = arith.constant 0 : index
    %c0_1 = arith.constant 0 : index
    %0 = vector.load %arg2[%c0, %c0_0, %c0_1] : memref<1x1x256xf32, #tpu.memory_space<vmem>>, vector<1x1x256xf32>
    %1 = vector.shape_cast %0 : vector<1x1x256xf32> to vector<1x256xf32>
    %c0_2 = arith.constant 0 : index
    %c0_3 = arith.constant 0 : index
    %2 = vector.load %arg3[%c0_2, %c0_3] : memref<1x256xf32, #tpu.memory_space<vmem>>, vector<1x256xf32>
    %3 = arith.addf %1, %2 : vector<1x256xf32>
    %c0_4 = arith.constant 0 : index
    %c0_5 = arith.constant 0 : index
    %c0_6 = arith.constant 0 : index
    %4 = vector.load %arg4[%c0_4, %c0_5, %c0_6] : memref<1x1x256xf32, #tpu.memory_space<vmem>>, vector<1x1x256xf32>
    %5 = vector.shape_cast %4 : vector<1x1x256xf32> to vector<1x256xf32>
    %6 = vector.shape_cast %3 : vector<1x256xf32> to vector<1x1x256xf32>
    tpu.vector_store %arg4[%c0_4, %c0_5, %c0_6], %6 {strides = array<i32>} : memref<1x1x256xf32, #tpu.memory_space<vmem>>, vector<1x1x256xf32>,
    return
  }
  func.func @transform_0(%arg0: i32, %arg1: i32) -> (i32, i32, i32) {
    %c0_i32 = arith.constant 0 : i32
    %c0_i32_0 = arith.constant 0 : i32
    return %arg1, %c0_i32, %arg0 : i32, i32, i32
  }
  func.func @transform_1(%arg0: i32, %arg1: i32) -> (i32, i32) {
    %c0_i32 = arith.constant 0 : i32
    %c0_i32_0 = arith.constant 0 : i32
    return %c0_i32, %arg0 : i32, i32
  }
  func.func @transform_2(%arg0: i32, %arg1: i32) -> (i32, i32, i32) {
    %c0_i32 = arith.constant 0 : i32
    %c0_i32_0 = arith.constant 0 : i32
    return %arg1, %c0_i32, %arg0 : i32, i32, i32
  }
}

</mosaic_0001>

<llo_original>
// kernel: tpu_custom_call.1
$region0: #{tpu_custom_call.1}
  #allocation0 [shape = 'u32[]', space=smem, size = 0x4, offset = 0x4, fixed_abs, tag = 'smem constant byte address 0x4 - core index']
  #allocation1 [shape = 'u32[144,128]{1,0:T(1,128)}', space=vmem, size = 0x12000, scoped, tag = 'internal scratch']
  %s0 = inlined_call_operand.hbm [shape: f32[2,1,256], index: 0, kind: input, shape index: {}]
  %s1 = inlined_call_operand.vmem [shape: f32[1,256], index: 1, kind: input, shape index: {}]
  %s2 = inlined_call_operand.hbm [shape: f32[2,1,256], index: 2, kind: output, shape index: {}]
  %s3 = sld [smem:[#allocation0]]
  $region45: #{tpu_custom_call.1} parent=0
    _
  %s5 = ssub.s32 1, %s3
  %s6 = scalar_select 0, %s5, %s3
  $region1: #{tpu_custom_call.1} parent=0
    #allocation2 [shape = 'u8[2048]{0}', space=vmem, size = 0x800, scoped, tag = 'input window, operand 0']
    #allocation3 [shape = 's32[2]{0}', space=sflag, size = 0x8, scoped, tag = 'scoped memory for tpu_custom_call.1']
    #allocation4 [shape = 's32[2]{0}', space=sflag, size = 0x8, scoped, tag = 'scoped memory for tpu_custom_call.1']
    #allocation5 [shape = 'u8[2048]{0}', space=vmem, size = 0x800, scoped, tag = 'output window, operand 0']
    %7 = vsyncpa [#allocation3], 0
    %s8 = scalar_lea.sflag [#allocation3], 1
    %9 = vsyncpa %s8, 0
    %10 = vsyncpa [#allocation4], 0
    %s11 = scalar_lea.sflag [#allocation4], 1
    %12 = vsyncpa %s11, 0
    loop: start=0, step=1, limit=4
    $region2: #{tpu_custom_call.1} parent=1 // loop_pre_header
      _
    $region3: #{tpu_custom_call.1} parent=1 // loop_header
      %s14 = sphi 0, %s18
      %p15 = scmp.ge.s32.totalorder %s14, 4
      %s21 = sphi 0, %s33
      %s22 = sphi 0, %s29
      %s23 = sphi 0, %s21
      %s24 = sphi 0, %s22
      %s25 = sphi 0, %s23
      %s26 = sphi 0, %s24
      %s38 = sphi 0, %s40
      %s41 = sphi 0, %s38
      %s42 = sphi 0, %s41
      %s58 = sphi 0, %s42
      %s64 = sphi 0, %s66
      %s67 = sphi 0, %s64
      %s68 = sphi 0, %s67
      %s84 = sphi 0, %s68
      %s92 = sphi 0, %s94
      %s95 = sphi 0, %s92
      %s96 = sphi 0, %s95
      %s112 = sphi 0, %s96
    $region4: #{tpu_custom_call.1} parent=1 // loop_header_branch
      %17 = sbr.rel (%p15) target = $region8
    $region5: #{tpu_custom_call.1} parent=1 // loop_body
      %s19 = ssub.s32 %s14, 1
      %s20 = ssub.s32 %s14, 2
      %s27 = sadd.s32 1, %s22
      %p28 = scmp.ge.s32.totalorder %s27, 2
      %s29 = scalar_select %p28, 0, %s27
      %s30 = sadd.s32 1, %s21
      %s31 = scalar_select %p28, %s30, %s21
      %p32 = scmp.ge.s32.totalorder %s31, 1
      %s33 = scalar_select %p32, 0, %s31
      %s34 = ssub.s32 %s22, %s29
      %s35 = ssub.s32 %s21, %s33
      %s36 = sor.u32 %s34, %s35
      %p37 = scmp.eq.s32.totalorder %s36, 0
      %s39 = sadd.s32 %s38, 1
      %s40 = scalar_select %p37, %s38, %s39
      %p43 = pneg %p37
      %p44 = scmp.eq.s32.totalorder %s14, 1
      %p45 = por %p43, %p44
      %p46 = scmp.ne.s32.totalorder %s38, %s41
      %p47 = scmp.eq.s32.totalorder %s14, 0
      %p48 = por %p46, %p47
      %p49 = scmp.ne.s32.totalorder %s38, %s41
      %p50 = scmp.eq.s32.totalorder %s19, 1
      %p51 = por %p49, %p50
      %p52 = scmp.ne.s32.totalorder %s41, %s42
      %p53 = scmp.eq.s32.totalorder %s19, 0
      %p54 = por %p52, %p53
      %p55 = scmp.ne.s32.totalorder %s41, %s42
      %p56 = scmp.eq.s32.totalorder %s20, 1
      %p57 = por %p55, %p56
      %p59 = scmp.ne.s32.totalorder %s42, %s58
      %p60 = scmp.eq.s32.totalorder %s20, 0
      %p61 = por %p59, %p60
      %s62 = ssub.s32 %s21, %s33
      %p63 = scmp.eq.s32.totalorder %s62, 0
      %s65 = sadd.s32 %s64, 1
      %s66 = scalar_select %p63, %s64, %s65
      %p69 = pneg %p63
      %p70 = scmp.eq.s32.totalorder %s14, 1
      %p71 = por %p69, %p70
      %p72 = scmp.ne.s32.totalorder %s64, %s67
      %p73 = scmp.eq.s32.totalorder %s14, 0
      %p74 = por %p72, %p73
      %p75 = scmp.ne.s32.totalorder %s64, %s67
      %p76 = scmp.eq.s32.totalorder %s19, 1
      %p77 = por %p75, %p76
      %p78 = scmp.ne.s32.totalorder %s67, %s68
      %p79 = scmp.eq.s32.totalorder %s19, 0
      %p80 = por %p78, %p79
      %p81 = scmp.ne.s32.totalorder %s67, %s68
      %p82 = scmp.eq.s32.totalorder %s20, 1
      %p83 = por %p81, %p82
      %p85 = scmp.ne.s32.totalorder %s68, %s84
      %p86 = scmp.eq.s32.totalorder %s20, 0
      %p87 = por %p85, %p86
      %s88 = ssub.s32 %s22, %s29
      %s89 = ssub.s32 %s21, %s33
      %s90 = sor.u32 %s88, %s89
      %p91 = scmp.eq.s32.totalorder %s90, 0
      %s93 = sadd.s32 %s92, 1
      %s94 = scalar_select %p91, %s92, %s93
      %p97 = pneg %p91
      %p98 = scmp.eq.s32.totalorder %s14, 1
      %p99 = por %p97, %p98
      %p100 = scmp.ne.s32.totalorder %s92, %s95
      %p101 = scmp.eq.s32.totalorder %s14, 0
      %p102 = por %p100, %p101
      %p103 = scmp.ne.s32.totalorder %s92, %s95
      %p104 = scmp.eq.s32.totalorder %s19, 1
      %p105 = por %p103, %p104
      %p106 = scmp.ne.s32.totalorder %s95, %s96
      %p107 = scmp.eq.s32.totalorder %s19, 0
      %p108 = por %p106, %p107
      %p109 = scmp.ne.s32.totalorder %s95, %s96
      %p110 = scmp.eq.s32.totalorder %s20, 1
      %p111 = por %p109, %p110
      %p113 = scmp.ne.s32.totalorder %s96, %s112
      %p114 = scmp.eq.s32.totalorder %s20, 0
      %p115 = por %p113, %p114
      %p116 = scmp.le.s32.totalorder 1, %s14
      %p117 = scmp.lt.s32.totalorder %s14, 3
      %p118 = pnand %p116, %p117
      %p119 = pneg %p118
      // Predicated region
      $region9: #{tpu_custom_call.1} parent=5 // pred_check
        _
      $region10: #{tpu_custom_call.1} parent=5 // pred_check_branch
        %121 = sbr.rel (%p118) target = $region12
      $region11: #{tpu_custom_call.1} parent=5 // pred_region
        %s122 = ssub.s32 %s14, 1
        // Predicated region
        $region13: #{tpu_custom_call.1} parent=11 // pred_check
          %p123 = pneg %p80
        $region14: #{tpu_custom_call.1} parent=11 // pred_check_branch
          %125 = sbr.rel (%p123) target = $region16
        $region15: #{tpu_custom_call.1} parent=11 // pred_region
          %s126 = smul.u32 2, %s23
          %p127 = scmp.lt.s32.totalorder %s126, 1
          %s128 = scalar_select %p127, %s126, 1
          %s129 = scalar_lea.vmem %s1, %s128
          %s130 = smul.u32 2, %s23
        $region16: #{tpu_custom_call.1} parent=11 // pred_fallthru
          _
      $region12: #{tpu_custom_call.1} parent=5 // pred_fallthru
        _
      %p131 = scmp.lt.s32.totalorder %s14, 2
      // Predicated region
      $region17: #{tpu_custom_call.1} parent=5 // pred_check
        %p132 = pneg %p131
      $region18: #{tpu_custom_call.1} parent=5 // pred_check_branch
        %134 = sbr.rel (%p132) target = $region20
      $region19: #{tpu_custom_call.1} parent=5 // pred_region
        // Predicated region
        $region21: #{tpu_custom_call.1} parent=19 // pred_check
          %p135 = pneg %p48
        $region22: #{tpu_custom_call.1} parent=19 // pred_check_branch
          %137 = sbr.rel (%p135) target = $region24
        $region23: #{tpu_custom_call.1} parent=19 // pred_region
          %s138 = sand.u32 %s38, 1
          %s139 = scalar_lea.sflag [#allocation3], %s138
          %s140 = sand.u32 %s38, 1
          %s141 = smul.addr %s140, 2
          %s142 = scalar_lea.vmem [#allocation2], %s141
          %s143 = smul.u32 2, %s21
          %s145 = ssub.s32 32, 32
          %146 = vsyncadd %s139, %s145
          %s147 = smul.addr %s22, 2
          %s148 = sadd.s32 %s143, %s147
          %s149 = smul.addr %s148, 16
          %s150 = scalar_lea.hbm %s0, %s149
          %s152 = sshll.u32 %s142, 4
          %s153 = int_to_ptr.vmem [resolvable:$true] %s152
          %155 = dma.hbm_to_vmem [thread:$0]  %s150, 32, %s153, %s139
        $region24: #{tpu_custom_call.1} parent=19 // pred_fallthru
          _
      $region20: #{tpu_custom_call.1} parent=5 // pred_fallthru
        _
      %p156 = scmp.le.s32.totalorder 1, %s14
      %p157 = scmp.lt.s32.totalorder %s14, 3
      %p158 = pnand %p156, %p157
      %p159 = pneg %p158
      // Predicated region
      $region25: #{tpu_custom_call.1} parent=5 // pred_check
        _
      $region26: #{tpu_custom_call.1} parent=5 // pred_check_branch
        %161 = sbr.rel (%p158) target = $region28
      $region27: #{tpu_custom_call.1} parent=5 // pred_region
        %s162 = ssub.s32 %s14, 1
        %s163 = sand.u32 %s41, 1
        %s164 = scalar_lea.sflag [#allocation3], %s163
        %s165 = sand.u32 %s41, 1
        %s166 = smul.addr %s165, 2
        %s167 = scalar_lea.vmem [#allocation2], %s166
        // Predicated region
        $region29: #{tpu_custom_call.1} parent=27 // pred_check
          %p168 = pneg %p54
        $region30: #{tpu_custom_call.1} parent=27 // pred_check_branch
          %170 = sbr.rel (%p168) target = $region32
        $region31: #{tpu_custom_call.1} parent=27 // pred_region
          %171 = dma.done %s164, 32
        $region32: #{tpu_custom_call.1} parent=27 // pred_fallthru
          _
        %s172 = sand.u32 %s41, 1
        %s173 = scalar_lea.sflag [#allocation3], %s172
        %s174 = sand.u32 %s41, 1
        %s175 = smul.addr %s174, 2
        %s176 = scalar_lea.vmem [#allocation2], %s175
        %p177 = pneg %p54
        %p178 = pneg %p51
        %s179 = smul.u32 2, %s23
        %p180 = scmp.lt.s32.totalorder %s179, 1
        %s181 = scalar_select %p180, %s179, 1
        %s182 = scalar_lea.vmem %s1, %s181
        %p183 = pneg %p80
        %p184 = pneg %p77
        %p185 = pneg %p108
        %p186 = pneg %p105
        %s187 = sand.u32 %s95, 1
        %s188 = scalar_lea.sflag [#allocation4], %s187
        %s189 = sand.u32 %s95, 1
        %s190 = smul.addr %s189, 2
        %s191 = scalar_lea.vmem [#allocation5], %s190
        %s192 = smul.u32 2, %s23
        %s193 = smul.u32 2, %s23
        %p194 = scmp.lt.s32.totalorder %s193, 1
        %s195 = scalar_select %p194, %s193, 1
        %s196 = scalar_lea.vmem %s1, %s195
        %s197 = smul.u32 2, %s23
        %s198 = smul.u32 2, %s23
        %v199 = vld [vmem:[%s167] sm:$0x3]
        %v200 = vld [vmem:[%s196] sm:$0x3]
        %v201 = vadd.f32 %v199, %v200
        %v202 = vlaneseq
        %vm203 = vcmp.ge.s32.totalorder %v202, 0
        %vm204 = vcmp.lt.s32.totalorder %v202, 256
        %vm205 = vmand %vm203, %vm204
        %206 = vst.msk [vmem:[%s191] sm:$0x3] %vm205, %v201
        %s207 = sand.u32 %s95, 1
        %s208 = scalar_lea.sflag [#allocation4], %s207
        %s209 = sand.u32 %s95, 1
        %s210 = smul.addr %s209, 2
        %s211 = scalar_lea.vmem [#allocation5], %s210
        // Predicated region
        $region33: #{tpu_custom_call.1} parent=27 // pred_check
          %p212 = pneg %p105
        $region34: #{tpu_custom_call.1} parent=27 // pred_check_branch
          %214 = sbr.rel (%p212) target = $region36
        $region35: #{tpu_custom_call.1} parent=27 // pred_region
          %s215 = smul.u32 2, %s23
          %s217 = ssub.s32 32, 32
          %218 = vsyncadd %s208, %s217
          %s219 = smul.addr %s24, 2
          %s220 = sadd.s32 %s215, %s219
          %s221 = smul.addr %s220, 16
          %s222 = scalar_lea.hbm %s2, %s221
          %s224 = sshll.u32 %s211, 4
          %s225 = int_to_ptr.vmem [resolvable:$true] %s224
          %227 = dma.vmem_to_hbm [thread:$0]  %s225, 32, %s222, %s208
        $region36: #{tpu_custom_call.1} parent=27 // pred_fallthru
          _
      $region28: #{tpu_custom_call.1} parent=5 // pred_fallthru
        _
      %p228 = scmp.le.s32.totalorder 2, %s14
      // Predicated region
      $region37: #{tpu_custom_call.1} parent=5 // pred_check
        %p229 = pneg %p228
      $region38: #{tpu_custom_call.1} parent=5 // pred_check_branch
        %231 = sbr.rel (%p229) target = $region40
      $region39: #{tpu_custom_call.1} parent=5 // pred_region
        %s232 = ssub.s32 %s14, 2
        // Predicated region
        $region41: #{tpu_custom_call.1} parent=39 // pred_check
          %p233 = pneg %p111
        $region42: #{tpu_custom_call.1} parent=39 // pred_check_branch
          %235 = sbr.rel (%p233) target = $region44
        $region43: #{tpu_custom_call.1} parent=39 // pred_region
          %s236 = sand.u32 %s96, 1
          %s237 = scalar_lea.sflag [#allocation4], %s236
          %s238 = sand.u32 %s96, 1
          %s239 = smul.addr %s238, 2
          %s240 = scalar_lea.vmem [#allocation5], %s239
          %241 = dma.done %s237, 32
        $region44: #{tpu_custom_call.1} parent=39 // pred_fallthru
          _
      $region40: #{tpu_custom_call.1} parent=5 // pred_fallthru
        _
    $region6: #{tpu_custom_call.1} parent=1 // loop_footer
      %s18 = sadd.s32 1, %s14
    $region7: #{tpu_custom_call.1} parent=1 // loop_footer_branch
      %13 = sbr.rel target = $region3
    $region8: #{tpu_custom_call.1} parent=1 // loop_exit
      _
    %242 = vsyncpa [#allocation3], 1
    %s243 = scalar_lea.sflag [#allocation3], 1
    %244 = vsyncpa %s243, 1
    %245 = vsyncpa [#allocation4], 1
    %s246 = scalar_lea.sflag [#allocation4], 1
    %247 = vsyncpa %s246, 1

</llo_original>
